<compile_context>
chip_gen: v6e
topology: v6e:2x2x1
jax: 0.10.0
libtpu: 0.0.40
codegen_flags: <defaults>
</compile_context>

<pallas_src>
import jax
import jax.numpy as jnp
from jax.experimental import pallas as pl
from jax.experimental.pallas import tpu as pltpu


# ---------------------------------------------------------------------------
# helpers
# ---------------------------------------------------------------------------
def _round_up(x, m):
    return ((x + m - 1) // m) * m


def _vmem_budget():
    """Generation-aware (max_block_bytes, vmem_limit_cap, min_grid_steps)."""
    try:
        cap = int(getattr(pltpu.get_tpu_info(), "vmem_capacity_bytes", 64 << 20))
    except Exception:
        cap = 64 << 20
    if cap >= (100 << 20):
        # v5e / v6e: 128 MiB VMEM per TensorCore, single core -> 2 steps suffice.
        return (20 << 20), (96 << 20), 2
    # v7x: 64 MiB physical VMEM -> smaller blocks + headroom below the cap,
    # and >=4 steps so each of the 2 megacore TCs gets >=2 steps to pipeline.
    return (10 << 20), (48 << 20), 4


def _choose_tile_m(M, per_mode_vmem_bytes, max_block_bytes, min_steps):
    """Largest mode-tile TM whose block fits the byte budget while keeping at
    least `min_steps` grid steps; then shrink TM to the smallest value giving
    the same step count (minimizes mode-axis padding)."""
    best = 1
    for tm in range(1, M + 1):
        if tm * per_mode_vmem_bytes > max_block_bytes:
            break
        if -(-M // tm) < min_steps:
            break
        best = tm
    steps = -(-M // best)
    return -(-M // steps)


# ---------------------------------------------------------------------------
# Pallas kernel: block of TM modes, dedup'd packed-complex channel mixing.
#   p1 = Ur @ W = [Ur@Wr | Ur@Wi],  p2 = Ui @ W = [Ui@Wr | Ui@Wi]
#   out = p1 + sign * roll(p2, Np/2)  = [Re | Im]
#   (Wr lives at lanes [0:Cout), Wi at lanes [Np/2:Np/2+Cout).)
# ---------------------------------------------------------------------------
def _spectral_mm_kernel(ur_ref, ui_ref, w_ref, o_ref):
    tm, bp, np_ = o_ref.shape
    half = np_ // 2
    w = w_ref[...]                                      # (tm, Cp, Np) bf16
    dn = (((2,), (1,)), ((0,), (0,)))                   # contract Cp, batch modes
    p1 = jax.lax.dot_general(ur_ref[...], w, dn,
                             preferred_element_type=jnp.float32)
    p2 = jax.lax.dot_general(ui_ref[...], w, dn,
                             preferred_element_type=jnp.float32)
    # combine in 2-D (lane-dim roll is the canonical XLU case)
    p1 = p1.reshape(tm * bp, np_)
    p2 = p2.reshape(tm * bp, np_)
    p2s = pltpu.roll(p2, shift=half, axis=1)            # [Ui@Wi | Ui@Wr]
    lane = jax.lax.broadcasted_iota(jnp.int32, p1.shape, 1)
    sign = jnp.where(lane < half, jnp.float32(-1.0), jnp.float32(1.0))
    o_ref[...] = (p1 + sign * p2s).reshape(o_ref.shape)


def spectral_channel_mix(ur_pk, ui_pk, w_pk, *, b, cin, cout):
    """Per-Fourier-mode complex channel mixing.

    ur_pk / ui_pk : (M, Bp, Cp) bf16 (real / imag activations)
    w_pk          : (M, Cp, Np) bf16 with Re(W) at lanes [:Cout] and Im(W) at
                    lanes [Np//2 : Np//2 + Cout]
    returns       : (M, Bp, Np) f32 with Re at lanes [:Cout], Im at [Np//2:...]
    """
    M, Bp, Cp = ur_pk.shape
    Np = w_pk.shape[-1]

    # VMEM footprint per mode (upper bound, accounting for (16/8,128) tiling)
    per_mode_vmem = (2 * 2 * _round_up(Bp, 16) * _round_up(Cp, 128)   # 2x bf16 u
                     + 2 * _round_up(Cp, 16) * _round_up(Np, 128)     # bf16 w
                     + 4 * _round_up(Bp, 8) * _round_up(Np, 128))     # f32 out

    max_block_bytes, vmem_cap, min_steps = _vmem_budget()
    tm = _choose_tile_m(M, per_mode_vmem, max_block_bytes, max(1, min(min_steps, M)))
    grid_m = pl.cdiv(M, tm)
    Mp = grid_m * tm
    if Mp != M:
        pad = Mp - M
        ur_pk = jnp.pad(ur_pk, ((0, pad), (0, 0), (0, 0)))
        ui_pk = jnp.pad(ui_pk, ((0, pad), (0, 0), (0, 0)))
        w_pk = jnp.pad(w_pk, ((0, pad), (0, 0), (0, 0)))

    # double-buffered blocks + margin, capped with headroom below physical VMEM
    vmem_limit = int(min(vmem_cap,
                         max(2 * tm * per_mode_vmem + (4 << 20), 16 << 20)))

    # honest (unpadded) cost: 4 real matmuls per complex mode
    cost = pl.CostEstimate(
        flops=8 * M * b * cin * cout,
        transcendentals=0,
        bytes_accessed=(2 * M * b * cin * 2        # u re+im (bf16)
                        + 2 * M * cin * cout * 2   # w re+im (bf16)
                        + 2 * M * b * cout * 4))   # out re+im (f32)

    out = pl.pallas_call(
        _spectral_mm_kernel,
        out_shape=jax.ShapeDtypeStruct((Mp, Bp, Np), jnp.float32),
        grid_spec=pltpu.PrefetchScalarGridSpec(
            num_scalar_prefetch=0,
            grid=(grid_m,),
            in_specs=[pl.BlockSpec((tm, Bp, Cp), lambda m: (m, 0, 0)),
                      pl.BlockSpec((tm, Bp, Cp), lambda m: (m, 0, 0)),
                      pl.BlockSpec((tm, Cp, Np), lambda m: (m, 0, 0))],
            out_specs=pl.BlockSpec((tm, Bp, Np), lambda m: (m, 0, 0))),
        compiler_params=pltpu.CompilerParams(
            dimension_semantics=("parallel",),
            vmem_limit_bytes=vmem_limit),
        cost_estimate=cost,
    )(ur_pk, ui_pk, w_pk)
    return out[:M]


# ---------------------------------------------------------------------------
# Module
# ---------------------------------------------------------------------------
class SpectralConv2d:
    def __init__(self, in_channels, out_channels, modes1, modes2, key):
        self.in_channels = in_channels
        self.out_channels = out_channels
        self.modes1 = modes1
        self.modes2 = modes2
        scale = 1.0 / (in_channels * out_channels)
        shape = (in_channels, out_channels, modes1, modes2)
        k1, k2, k3, k4 = jax.random.split(key, 4)
        # torch.rand(..., dtype=torch.cfloat): real and imag parts ~ U[0, 1)
        self.w1_r = scale * jax.random.uniform(k1, shape, jnp.float32)
        self.w1_i = scale * jax.random.uniform(k2, shape, jnp.float32)
        self.w2_r = scale * jax.random.uniform(k3, shape, jnp.float32)
        self.w2_i = scale * jax.random.uniform(k4, shape, jnp.float32)

        # ---- pre-packed weights, built ONCE (not per forward call) ----
        Cin, Cout = in_channels, out_channels
        self.Cp = _round_up(Cin, 8)            # contraction dim: sublane pad only
        self.Np = _round_up(2 * Cout, 128)     # lane-dense output stores
        half = self.Np // 2
        M = 2 * modes1 * modes2

        def _modes_first(w):  # (Cin, Cout, m1, m2) -> (m1*m2, Cin, Cout)
            return jnp.transpose(w, (2, 3, 0, 1)).reshape(modes1 * modes2, Cin, Cout)

        wr = jnp.concatenate([_modes_first(self.w1_r), _modes_first(self.w2_r)], axis=0)
        wi = jnp.concatenate([_modes_first(self.w1_i), _modes_first(self.w2_i)], axis=0)
        # Single-copy packing (no duplicated [[wr,wi],[-wi,wr]] block):
        # Re(W) at lanes [0:Cout), Im(W) at lanes [Np/2:Np/2+Cout).
        w = jnp.zeros((M, self.Cp, self.Np), jnp.float32)
        w = w.at[:, :Cin, :Cout].set(wr)
        w = w.at[:, :Cin, half:half + Cout].set(wi)
        self.w_packed = w.astype(jnp.bfloat16)

    def __call__(self, u):
        # layout: NCHW  (B, Cin, H, W)  float32
        B, Cin, H, W = u.shape
        m1, m2 = self.modes1, self.modes2
        Cout = self.out_channels
        M = 2 * m1 * m2
        Bp = _round_up(B, 8)
        Cp, Np = self.Cp, self.Np
        half = Np // 2

        # TODO(synk): rfft2 / irfft2 have no clean Pallas TPU primitive; they
        # stay in XLA (jnp.fft). The complex channel-mixing hot path is Pallas.
        u_ft = jnp.fft.rfft2(u)                                    # (B,Cin,H,W//2+1) c64

        # retained corner blocks of the spectrum
        u_low = jnp.concatenate([u_ft[:, :, :m1, :m2],
                                 u_ft[:, :, -m1:, :m2]], axis=2)   # (B,Cin,2m1,m2)

        def pack(x):  # (B,Cin,2m1,m2) f32 -> (M, Bp, Cp) bf16 (modes leading)
            x = jnp.transpose(x, (2, 3, 0, 1)).reshape(M, B, Cin)
            return jnp.pad(x, ((0, 0), (0, Bp - B), (0, Cp - Cin))).astype(jnp.bfloat16)

        ur_pk = pack(jnp.real(u_low))
        ui_pk = pack(jnp.imag(u_low))

        out = spectral_channel_mix(ur_pk, ui_pk, self.w_packed,
                                   b=B, cin=Cin, cout=Cout)        # (M, Bp, Np) f32

        factor = (out[:, :B, :Cout]
                  + 1j * out[:, :B, half:half + Cout]).astype(jnp.complex64)
        factor = factor.reshape(2, m1, m2, B, Cout)
        factor = jnp.transpose(factor, (0, 3, 4, 1, 2))            # (2,B,Cout,m1,m2)

        wf = W // 2 + 1
        if H >= 2 * m1 and m2 <= wf:
            # build the output spectrum by concat + pad (no full zero spectrum
            # materialization + two scatters)
            mid = jnp.zeros((B, Cout, H - 2 * m1, m2), jnp.complex64)
            spec = jnp.concatenate([factor[0], mid, factor[1]], axis=2)  # (B,Cout,H,m2)
            out_ft = jnp.pad(spec, ((0, 0), (0, 0), (0, 0), (0, wf - m2)))
        else:
            out_ft = jnp.zeros((B, Cout, H, wf), dtype=jnp.complex64)
            out_ft = out_ft.at[:, :, :m1, :m2].set(factor[0])
            out_ft = out_ft.at[:, :, -m1:, :m2].set(factor[1])
        return jnp.fft.irfft2(out_ft, s=(H, W))                    # (B, Cout, H, W)


# ---------------------------------------------------------------------------
# Reference (pure JAX, mirrors the PyTorch forward).
# cast_dtype=jnp.bfloat16 reproduces the kernel's input rounding (f32 accum).
# ---------------------------------------------------------------------------
def reference_forward(mod: SpectralConv2d, u, cast_dtype=None):
    B, Cin, H, W = u.shape
    m1, m2 = mod.modes1, mod.modes2
    hi = jax.lax.Precision.HIGHEST

    def mix(uf, wr, wi):
        ur, ui = jnp.real(uf), jnp.imag(uf)
        if cast_dtype is not None:
            ur = ur.astype(cast_dtype).astype(jnp.float32)
            ui = ui.astype(cast_dtype).astype(jnp.float32)
            wr = wr.astype(cast_dtype).astype(jnp.float32)
            wi = wi.astype(cast_dtype).astype(jnp.float32)
        re = (jnp.einsum('bixy,ioxy->boxy', ur, wr, precision=hi)
              - jnp.einsum('bixy,ioxy->boxy', ui, wi, precision=hi))
        im = (jnp.einsum('bixy,ioxy->boxy', ur, wi, precision=hi)
              + jnp.einsum('bixy,ioxy->boxy', ui, wr, precision=hi))
        return (re + 1j * im).astype(jnp.complex64)

    u_ft = jnp.fft.rfft2(u)
    f1 = mix(u_ft[:, :, :m1, :m2], mod.w1_r, mod.w1_i)
    f2 = mix(u_ft[:, :, -m1:, :m2], mod.w2_r, mod.w2_i)
    out_ft = jnp.zeros((B, mod.out_channels, H, W // 2 + 1), dtype=jnp.complex64)
    out_ft = out_ft.at[:, :, :m1, :m2].set(f1)
    out_ft = out_ft.at[:, :, -m1:, :m2].set(f2)
    return jnp.fft.irfft2(out_ft, s=(H, W))


if __name__ == "__main__":
    key = jax.random.PRNGKey(0)
    k_w, k_u = jax.random.split(key)

    B, Cin, Cout = 2, 4, 4
    H = W = 16
    modes1 = modes2 = 4

    mod = SpectralConv2d(Cin, Cout, modes1, modes2, key=k_w)
    u = jax.random.normal(k_u, (B, Cin, H, W), dtype=jnp.float32)

    fwd = jax.jit(lambda x: mod(x))
    out = jax.block_until_ready(fwd(u))
    assert out.shape == (B, Cout, H, W)

    # tight check vs a reference that mirrors the kernel's bf16 input rounding
    ref_bf16 = jax.block_until_ready(reference_forward(mod, u, cast_dtype=jnp.bfloat16))
    assert jnp.allclose(out, ref_bf16, atol=5e-4, rtol=5e-4), \
        "mismatch vs bf16-matched reference"

    # sanity check vs the full-f32 reference (bf16 MXU inputs, f32 accumulate)
    ref_f32 = jax.block_until_ready(reference_forward(mod, u))
    assert jnp.allclose(out, ref_f32, atol=3e-2, rtol=3e-2), \
        "mismatch vs f32 reference"

    print("KERNEL_OK")
</pallas_src>

<mosaic_0001>
module attributes {stable_mosaic.version = 11 : i64} {
  func.func @_spectral_mm_kernel(%arg0: i32, %arg1: memref<8x8x8xbf16, #tpu.memory_space<vmem>>, %arg2: memref<8x8x8xbf16, #tpu.memory_space<vmem>>, %arg3: memref<8x8x128xbf16, #tpu.memory_space<vmem>>, %arg4: memref<8x8x128xf32, #tpu.memory_space<vmem>>) attributes {dimension_semantics = [#tpu.dimension_semantics<parallel>], iteration_bounds = array<i64: 4>, scalar_prefetch = 0 : i64, scratch_operands = 0 : i64, tpu.core_type = #tpu.core_type<tc>, window_params = [{transform_indices = @transform_0, window_bounds = array<i64: 8, 8, 8>}, {transform_indices = @transform_1, window_bounds = array<i64: 8, 8, 8>}, {transform_indices = @transform_2, window_bounds = array<i64: 8, 8, 128>}, {transform_indices = @transform_3, window_bounds = array<i64: 8, 8, 128>}]} {
    %c0 = arith.constant 0 : index
    %c0_0 = arith.constant 0 : index
    %c0_1 = arith.constant 0 : index
    %0 = vector.load %arg3[%c0, %c0_0, %c0_1] : memref<8x8x128xbf16, #tpu.memory_space<vmem>>, vector<8x8x128xbf16>
    %c0_2 = arith.constant 0 : index
    %c0_3 = arith.constant 0 : index
    %c0_4 = arith.constant 0 : index
    %1 = vector.load %arg1[%c0_2, %c0_3, %c0_4] : memref<8x8x8xbf16, #tpu.memory_space<vmem>>, vector<8x8x8xbf16>
    %cst = arith.constant dense<0.000000e+00> : vector<8x8x128xf32>
    %2 = tpu.matmul %1, %0, %cst {dimension_numbers = #tpu.dot_dimension_numbers<[2], [1], [1], [2], [0, 0, 0, 1, 1, 2], [0], [0]>} : vector<8x8x8xbf16>, vector<8x8x128xbf16>, vector<8x8x128xf32> -> vector<8x8x128xf32>
    %c0_5 = arith.constant 0 : index
    %c0_6 = arith.constant 0 : index
    %c0_7 = arith.constant 0 : index
    %3 = vector.load %arg2[%c0_5, %c0_6, %c0_7] : memref<8x8x8xbf16, #tpu.memory_space<vmem>>, vector<8x8x8xbf16>
    %cst_8 = arith.constant dense<0.000000e+00> : vector<8x8x128xf32>
    %4 = tpu.matmul %3, %0, %cst_8 {dimension_numbers = #tpu.dot_dimension_numbers<[2], [1], [1], [2], [0, 0, 0, 1, 1, 2], [0], [0]>} : vector<8x8x8xbf16>, vector<8x8x128xbf16>, vector<8x8x128xf32> -> vector<8x8x128xf32>
    %5 = vector.shape_cast %2 : vector<8x8x128xf32> to vector<64x128xf32>
    %6 = vector.shape_cast %4 : vector<8x8x128xf32> to vector<64x128xf32>
    %c64_i32 = arith.constant 64 : i32
    %7 = tpu.dynamic_rotate %6 by %c64_i32 dim 1 : vector<64x128xf32>, i32 -> vector<64x128xf32>
    %8 = tpu.iota {dimensions = array<i32: 1>} : vector<64x128xi32>
    %c64_i32_9 = arith.constant 64 : i32
    %9 = vector.broadcast %c64_i32_9 : i32 to vector<64x128xi32>
    %10 = arith.cmpi slt, %8, %9 : vector<64x128xi32>
    %cst_10 = arith.constant -1.000000e+00 : f32
    %cst_11 = arith.constant 1.000000e+00 : f32
    %11 = vector.broadcast %cst_10 : f32 to vector<64x128xf32>
    %12 = vector.broadcast %cst_11 : f32 to vector<64x128xf32>
    %13 = arith.select %10, %11, %12 : vector<64x128xi1>, vector<64x128xf32>
    %14 = arith.mulf %13, %7 : vector<64x128xf32>
    %15 = arith.addf %5, %14 : vector<64x128xf32>
    %16 = vector.shape_cast %15 : vector<64x128xf32> to vector<8x8x128xf32>
    %c0_12 = arith.constant 0 : index
    %c0_13 = arith.constant 0 : index
    %c0_14 = arith.constant 0 : index
    %17 = vector.load %arg4[%c0_12, %c0_13, %c0_14] : memref<8x8x128xf32, #tpu.memory_space<vmem>>, vector<8x8x128xf32>
    tpu.vector_store %arg4[%c0_12, %c0_13, %c0_14], %16 {strides = array<i32>} : memref<8x8x128xf32, #tpu.memory_space<vmem>>, vector<8x8x128xf32>,
    return
  }
  func.func @transform_0(%arg0: i32) -> (i32, i32, i32) {
    %c0_i32 = arith.constant 0 : i32
    %c0_i32_0 = arith.constant 0 : i32
    %c0_i32_1 = arith.constant 0 : i32
    return %arg0, %c0_i32, %c0_i32_0 : i32, i32, i32
  }
  func.func @transform_1(%arg0: i32) -> (i32, i32, i32) {
    %c0_i32 = arith.constant 0 : i32
    %c0_i32_0 = arith.constant 0 : i32
    %c0_i32_1 = arith.constant 0 : i32
    return %arg0, %c0_i32, %c0_i32_0 : i32, i32, i32
  }
  func.func @transform_2(%arg0: i32) -> (i32, i32, i32) {
    %c0_i32 = arith.constant 0 : i32
    %c0_i32_0 = arith.constant 0 : i32
    %c0_i32_1 = arith.constant 0 : i32
    return %arg0, %c0_i32, %c0_i32_0 : i32, i32, i32
  }
  func.func @transform_3(%arg0: i32) -> (i32, i32, i32) {
    %c0_i32 = arith.constant 0 : i32
    %c0_i32_0 = arith.constant 0 : i32
    %c0_i32_1 = arith.constant 0 : i32
    return %arg0, %c0_i32, %c0_i32_0 : i32, i32, i32
  }
}

</mosaic_0001>

<llo_original>
// kernel: reverse.1
$region0: #{reverse.1}
  %s0 = inlined_call_operand.vmem [shape: f32[2,4,16,7], index: 0, kind: input, shape index: {}]
  %s1 = inlined_call_operand.vmem [shape: f32[2,4,16,7], index: 1, kind: output, shape index: {}]
  $region1: #{reverse.1} parent=0
    #allocation0 [shape = 'u8[65536]{0}', space=vmem, size = 0x10000, scoped, tag = 'operand span for operand 0']
    #allocation1 [shape = 'u8[32768]{0}', space=vmem, size = 0x8000, scoped, tag = 'operand span for operand 1']
    %s2 = scalar_lea.vmem [#allocation0], 8
    // Predicated region
    $region2: #{reverse.1} parent=1 // pred_check
      _
    $region3: #{reverse.1} parent=1 // pred_check_branch
      %4 = sbr.rel (0) target = $region5
    $region4: #{reverse.1} parent=1 // pred_region
      // Predicated region
      $region6: #{reverse.1} parent=4 // pred_check
        _
      $region7: #{reverse.1} parent=4 // pred_check_branch
        %6 = sbr.rel (0) target = $region9
      $region8: #{reverse.1} parent=4 // pred_region
        // Predicated region
        $region21: #{reverse.1} parent=8 // pred_check
          _
        $region22: #{reverse.1} parent=8 // pred_check_branch
          %36 = sbr.rel (0) target = $region24
        $region23: #{reverse.1} parent=8 // pred_region
          loop: start=0, step=1, limit=1
          $region25: #{reverse.1} parent=23 // loop_pre_header
            _
          $region26: #{reverse.1} parent=23 // loop_header
            %s38 = sphi 0, %s42
            %p39 = scmp.ge.s32.totalorder %s38, 1
            %s43 = sphi %s0, %s0
            %s44 = sphi %s2, %s2
          $region27: #{reverse.1} parent=23 // loop_header_branch
            %41 = sbr.rel (%p39) target = $region31
          $region28: #{reverse.1} parent=23 // loop_body
            %v45 = vld [vmem:[%s43] sm:$0xff]
            %46 = vst [vmem:[%s44] sm:$0xff] %v45
            %v47 = vld [vmem:[%s43 + $0x8] sm:$0xff]
            %48 = vst [vmem:[%s44 + $0x10] sm:$0xff] %v47
            %v49 = vld [vmem:[%s43 + $0x10] sm:$0xff]
            %50 = vst [vmem:[%s44 + $0x20] sm:$0xff] %v49
            %v51 = vld [vmem:[%s43 + $0x18] sm:$0xff]
            %52 = vst [vmem:[%s44 + $0x30] sm:$0xff] %v51
            %v53 = vld [vmem:[%s43 + $0x20] sm:$0xff]
            %54 = vst [vmem:[%s44 + $0x40] sm:$0xff] %v53
            %v55 = vld [vmem:[%s43 + $0x28] sm:$0xff]
            %56 = vst [vmem:[%s44 + $0x50] sm:$0xff] %v55
            %v57 = vld [vmem:[%s43 + $0x30] sm:$0xff]
            %58 = vst [vmem:[%s44 + $0x60] sm:$0xff] %v57
            %v59 = vld [vmem:[%s43 + $0x38] sm:$0xff]
            %60 = vst [vmem:[%s44 + $0x70] sm:$0xff] %v59
          $region29: #{reverse.1} parent=23 // loop_footer
            %s42 = sadd.s32 1, %s38
          $region30: #{reverse.1} parent=23 // loop_footer_branch
            %37 = sbr.rel target = $region26
          $region31: #{reverse.1} parent=23 // loop_exit
            _
        $region24: #{reverse.1} parent=8 // pred_fallthru
          _
        // Predicated region
        $region32: #{reverse.1} parent=8 // pred_check
          _
        $region33: #{reverse.1} parent=8 // pred_check_branch
          %62 = sbr.rel target = $region35
        $region34: #{reverse.1} parent=8 // pred_region
          _
        $region35: #{reverse.1} parent=8 // pred_fallthru
          _
      $region9: #{reverse.1} parent=4 // pred_fallthru
        _
      // Predicated region
      $region10: #{reverse.1} parent=4 // pred_check
        _
      $region11: #{reverse.1} parent=4 // pred_check_branch
        %8 = sbr.rel target = $region13
      $region12: #{reverse.1} parent=4 // pred_region
        %s10 = ssub.s32 256, 1
        loop: start=0, step=1, limit=1
        $region14: #{reverse.1} parent=12 // loop_pre_header
          _
        $region15: #{reverse.1} parent=12 // loop_header
          %s12 = sphi 0, %s16
          %p13 = scmp.ge.s32.totalorder %s12, 1
          %s17 = sphi %s0, %s0
          %s18 = sphi %s2, %s2
        $region16: #{reverse.1} parent=12 // loop_header_branch
          %15 = sbr.rel (%p13) target = $region20
        $region17: #{reverse.1} parent=12 // loop_body
          %v19 = vld [vmem:[%s17] sm:%s10]
          %20 = vst [vmem:[%s18] sm:%s10] %v19
          %v21 = vld [vmem:[%s17 + $0x8] sm:%s10]
          %22 = vst [vmem:[%s18 + $0x10] sm:%s10] %v21
          %v23 = vld [vmem:[%s17 + $0x10] sm:%s10]
          %24 = vst [vmem:[%s18 + $0x20] sm:%s10] %v23
          %v25 = vld [vmem:[%s17 + $0x18] sm:%s10]
          %26 = vst [vmem:[%s18 + $0x30] sm:%s10] %v25
          %v27 = vld [vmem:[%s17 + $0x20] sm:%s10]
          %28 = vst [vmem:[%s18 + $0x40] sm:%s10] %v27
          %v29 = vld [vmem:[%s17 + $0x28] sm:%s10]
          %30 = vst [vmem:[%s18 + $0x50] sm:%s10] %v29
          %v31 = vld [vmem:[%s17 + $0x30] sm:%s10]
          %32 = vst [vmem:[%s18 + $0x60] sm:%s10] %v31
          %v33 = vld [vmem:[%s17 + $0x38] sm:%s10]
          %34 = vst [vmem:[%s18 + $0x70] sm:%s10] %v33
        $region18: #{reverse.1} parent=12 // loop_footer
          %s16 = sadd.s32 1, %s12
        $region19: #{reverse.1} parent=12 // loop_footer_branch
          %11 = sbr.rel target = $region15
        $region20: #{reverse.1} parent=12 // loop_exit
          _
      $region13: #{reverse.1} parent=4 // pred_fallthru
        _
    $region5: #{reverse.1} parent=1 // pred_fallthru
      _
    %63 = vnop
    %s64 = scalar_lea.vmem [#allocation0], 7
    %v65 = vld [vmem:[%s64] ss:$-1 sm:$0xff]
    %v66 = vrot.slane %v65, 1
    %67 = vst [vmem:[#allocation1] sm:$0xff] %v66
    %s68 = scalar_lea.vmem [#allocation0], 8
    %s69 = scalar_lea.vmem %s68, 7 [#allocation0]
    %v70 = vld [vmem:[%s69] ss:$-1 sm:$0xff]
    %v71 = vrot.slane %v70, 1
    %v72 = vlaneseq
    %v73 = vshrl.u32 %v72, 7
    %vm74 = vcmp.lt.s32.totalorder %v73, 7
    %75 = vst.msk [vmem:[#allocation1] sm:$0xff] %vm74, %v71
    %s76 = scalar_lea.vmem [#allocation1], 8
    %s77 = scalar_lea.vmem [#allocation0], 16
    %s78 = scalar_lea.vmem %s77, 7 [#allocation0]
    %v79 = vld [vmem:[%s78] ss:$-1 sm:$0xff]
    %v80 = vrot.slane %v79, 1
    %81 = vst [vmem:[%s76] sm:$0xff] %v80
    %s82 = scalar_lea.vmem %s77, 8 [#allocation0]
    %s83 = scalar_lea.vmem %s82, 7 [#allocation0]
    %v84 = vld [vmem:[%s83] ss:$-1 sm:$0xff]
    %v85 = vrot.slane %v84, 1
    %v86 = vlaneseq
    %v87 = vshrl.u32 %v86, 7
    %vm88 = vcmp.lt.s32.totalorder %v87, 7
    %89 = vst.msk [vmem:[%s76] sm:$0xff] %vm88, %v85
    %s90 = scalar_lea.vmem [#allocation1], 16
    %s91 = scalar_lea.vmem [#allocation0], 32
    %s92 = scalar_lea.vmem %s91, 7 [#allocation0]
    %v93 = vld [vmem:[%s92] ss:$-1 sm:$0xff]
    %v94 = vrot.slane %v93, 1
    %95 = vst [vmem:[%s90] sm:$0xff] %v94
    %s96 = scalar_lea.vmem %s91, 8 [#allocation0]
    %s97 = scalar_lea.vmem %s96, 7 [#allocation0]
    %v98 = vld [vmem:[%s97] ss:$-1 sm:$0xff]
    %v99 = vrot.slane %v98, 1
    %v100 = vlaneseq
    %v101 = vshrl.u32 %v100, 7
    %vm102 = vcmp.lt.s32.totalorder %v101, 7
    %103 = vst.msk [vmem:[%s90] sm:$0xff] %vm102, %v99
    %s104 = scalar_lea.vmem [#allocation1], 24
    %s105 = scalar_lea.vmem [#allocation0], 48
    %s106 = scalar_lea.vmem %s105, 7 [#allocation0]
    %v107 = vld [vmem:[%s106] ss:$-1 sm:$0xff]
    %v108 = vrot.slane %v107, 1
    %109 = vst [vmem:[%s104] sm:$0xff] %v108
    %s110 = scalar_lea.vmem %s105, 8 [#allocation0]
    %s111 = scalar_lea.vmem %s110, 7 [#allocation0]
    %v112 = vld [vmem:[%s111] ss:$-1 sm:$0xff]
    %v113 = vrot.slane %v112, 1
    %v114 = vlaneseq
    %v115 = vshrl.u32 %v114, 7
    %vm116 = vcmp.lt.s32.totalorder %v115, 7
    %117 = vst.msk [vmem:[%s104] sm:$0xff] %vm116, %v113
    %s118 = scalar_lea.vmem [#allocation1], 32
    %s119 = scalar_lea.vmem [#allocation0], 64
    %s120 = scalar_lea.vmem %s119, 7 [#allocation0]
    %v121 = vld [vmem:[%s120] ss:$-1 sm:$0xff]
    %v122 = vrot.slane %v121, 1
    %123 = vst [vmem:[%s118] sm:$0xff] %v122
    %s124 = scalar_lea.vmem %s119, 8 [#allocation0]
    %s125 = scalar_lea.vmem %s124, 7 [#allocation0]
    %v126 = vld [vmem:[%s125] ss:$-1 sm:$0xff]
    %v127 = vrot.slane %v126, 1
    %v128 = vlaneseq
    %v129 = vshrl.u32 %v128, 7
    %vm130 = vcmp.lt.s32.totalorder %v129, 7
    %131 = vst.msk [vmem:[%s118] sm:$0xff] %vm130, %v127
    %s132 = scalar_lea.vmem [#allocation1], 40
    %s133 = scalar_lea.vmem [#allocation0], 80
    %s134 = scalar_lea.vmem %s133, 7 [#allocation0]
    %v135 = vld [vmem:[%s134] ss:$-1 sm:$0xff]
    %v136 = vrot.slane %v135, 1
    %137 = vst [vmem:[%s132] sm:$0xff] %v136
    %s138 = scalar_lea.vmem %s133, 8 [#allocation0]
    %s139 = scalar_lea.vmem %s138, 7 [#allocation0]
    %v140 = vld [vmem:[%s139] ss:$-1 sm:$0xff]
    %v141 = vrot.slane %v140, 1
    %v142 = vlaneseq
    %v143 = vshrl.u32 %v142, 7
    %vm144 = vcmp.lt.s32.totalorder %v143, 7
    %145 = vst.msk [vmem:[%s132] sm:$0xff] %vm144, %v141
    %s146 = scalar_lea.vmem [#allocation1], 48
    %s147 = scalar_lea.vmem [#allocation0], 96
    %s148 = scalar_lea.vmem %s147, 7 [#allocation0]
    %v149 = vld [vmem:[%s148] ss:$-1 sm:$0xff]
    %v150 = vrot.slane %v149, 1
    %151 = vst [vmem:[%s146] sm:$0xff] %v150
    %s152 = scalar_lea.vmem %s147, 8 [#allocation0]
    %s153 = scalar_lea.vmem %s152, 7 [#allocation0]
    %v154 = vld [vmem:[%s153] ss:$-1 sm:$0xff]
    %v155 = vrot.slane %v154, 1
    %v156 = vlaneseq
    %v157 = vshrl.u32 %v156, 7
    %vm158 = vcmp.lt.s32.totalorder %v157, 7
    %159 = vst.msk [vmem:[%s146] sm:$0xff] %vm158, %v155
    %s160 = scalar_lea.vmem [#allocation1], 56
    %s161 = scalar_lea.vmem [#allocation0], 112
    %s162 = scalar_lea.vmem %s161, 7 [#allocation0]
    %v163 = vld [vmem:[%s162] ss:$-1 sm:$0xff]
    %v164 = vrot.slane %v163, 1
    %165 = vst [vmem:[%s160] sm:$0xff] %v164
    %s166 = scalar_lea.vmem %s161, 8 [#allocation0]
    %s167 = scalar_lea.vmem %s166, 7 [#allocation0]
    %v168 = vld [vmem:[%s167] ss:$-1 sm:$0xff]
    %v169 = vrot.slane %v168, 1
    %v170 = vlaneseq
    %v171 = vshrl.u32 %v170, 7
    %vm172 = vcmp.lt.s32.totalorder %v171, 7
    %173 = vst.msk [vmem:[%s160] sm:$0xff] %vm172, %v169
    // Predicated region
    $region36: #{reverse.1} parent=1 // pred_check
      _
    $region37: #{reverse.1} parent=1 // pred_check_branch
      %175 = sbr.rel (0) target = $region39
    $region38: #{reverse.1} parent=1 // pred_region
      // Predicated region
      $region40: #{reverse.1} parent=38 // pred_check
        _
      $region41: #{reverse.1} parent=38 // pred_check_branch
        %177 = sbr.rel (0) target = $region43
      $region42: #{reverse.1} parent=38 // pred_region
        // Predicated region
        $region55: #{reverse.1} parent=42 // pred_check
          _
        $region56: #{reverse.1} parent=42 // pred_check_branch
          %207 = sbr.rel (0) target = $region58
        $region57: #{reverse.1} parent=42 // pred_region
          loop: start=0, step=1, limit=1
          $region59: #{reverse.1} parent=57 // loop_pre_header
            _
          $region60: #{reverse.1} parent=57 // loop_header
            %s209 = sphi 0, %s213
            %p210 = scmp.ge.s32.totalorder %s209, 1
            %s214 = sphi [#allocation1], [#allocation1]
            %s215 = sphi %s1, %s1
          $region61: #{reverse.1} parent=57 // loop_header_branch
            %212 = sbr.rel (%p210) target = $region65
          $region62: #{reverse.1} parent=57 // loop_body
            %v216 = vld [vmem:[%s214] sm:$0xff]
            %217 = vst [vmem:[%s215] sm:$0xff] %v216
            %v218 = vld [vmem:[%s214 + $0x8] sm:$0xff]
            %219 = vst [vmem:[%s215 + $0x8] sm:$0xff] %v218
            %v220 = vld [vmem:[%s214 + $0x10] sm:$0xff]
            %221 = vst [vmem:[%s215 + $0x10] sm:$0xff] %v220
            %v222 = vld [vmem:[%s214 + $0x18] sm:$0xff]
            %223 = vst [vmem:[%s215 + $0x18] sm:$0xff] %v222
            %v224 = vld [vmem:[%s214 + $0x20] sm:$0xff]
            %225 = vst [vmem:[%s215 + $0x20] sm:$0xff] %v224
            %v226 = vld [vmem:[%s214 + $0x28] sm:$0xff]
            %227 = vst [vmem:[%s215 + $0x28] sm:$0xff] %v226
            %v228 = vld [vmem:[%s214 + $0x30] sm:$0xff]
            %229 = vst [vmem:[%s215 + $0x30] sm:$0xff] %v228
            %v230 = vld [vmem:[%s214 + $0x38] sm:$0xff]
            %231 = vst [vmem:[%s215 + $0x38] sm:$0xff] %v230
          $region63: #{reverse.1} parent=57 // loop_footer
            %s213 = sadd.s32 1, %s209
          $region64: #{reverse.1} parent=57 // loop_footer_branch
            %208 = sbr.rel target = $region60
          $region65: #{reverse.1} parent=57 // loop_exit
            _
        $region58: #{reverse.1} parent=42 // pred_fallthru
          _
        // Predicated region
        $region66: #{reverse.1} parent=42 // pred_check
          _
        $region67: #{reverse.1} parent=42 // pred_check_branch
          %233 = sbr.rel target = $region69
        $region68: #{reverse.1} parent=42 // pred_region
          _
        $region69: #{reverse.1} parent=42 // pred_fallthru
          _
      $region43: #{reverse.1} parent=38 // pred_fallthru
        _
      // Predicated region
      $region44: #{reverse.1} parent=38 // pred_check
        _
      $region45: #{reverse.1} parent=38 // pred_check_branch
        %179 = sbr.rel target = $region47
      $region46: #{reverse.1} parent=38 // pred_region
        %s181 = ssub.s32 256, 1
        loop: start=0, step=1, limit=1
        $region48: #{reverse.1} parent=46 // loop_pre_header
          _
        $region49: #{reverse.1} parent=46 // loop_header
          %s183 = sphi 0, %s187
          %p184 = scmp.ge.s32.totalorder %s183, 1
          %s188 = sphi [#allocation1], [#allocation1]
          %s189 = sphi %s1, %s1
        $region50: #{reverse.1} parent=46 // loop_header_branch
          %186 = sbr.rel (%p184) target = $region54
        $region51: #{reverse.1} parent=46 // loop_body
          %v190 = vld [vmem:[%s188] sm:%s181]
          %191 = vst [vmem:[%s189] sm:%s181] %v190
          %v192 = vld [vmem:[%s188 + $0x8] sm:%s181]
          %193 = vst [vmem:[%s189 + $0x8] sm:%s181] %v192
          %v194 = vld [vmem:[%s188 + $0x10] sm:%s181]
          %195 = vst [vmem:[%s189 + $0x10] sm:%s181] %v194
          %v196 = vld [vmem:[%s188 + $0x18] sm:%s181]
          %197 = vst [vmem:[%s189 + $0x18] sm:%s181] %v196
          %v198 = vld [vmem:[%s188 + $0x20] sm:%s181]
          %199 = vst [vmem:[%s189 + $0x20] sm:%s181] %v198
          %v200 = vld [vmem:[%s188 + $0x28] sm:%s181]
          %201 = vst [vmem:[%s189 + $0x28] sm:%s181] %v200
          %v202 = vld [vmem:[%s188 + $0x30] sm:%s181]
          %203 = vst [vmem:[%s189 + $0x30] sm:%s181] %v202
          %v204 = vld [vmem:[%s188 + $0x38] sm:%s181]
          %205 = vst [vmem:[%s189 + $0x38] sm:%s181] %v204
        $region52: #{reverse.1} parent=46 // loop_footer
          %s187 = sadd.s32 1, %s183
        $region53: #{reverse.1} parent=46 // loop_footer_branch
          %182 = sbr.rel target = $region49
        $region54: #{reverse.1} parent=46 // loop_exit
          _
      $region47: #{reverse.1} parent=38 // pred_fallthru
        _
    $region39: #{reverse.1} parent=1 // pred_fallthru
      _
    %234 = vnop

// kernel: _lambda_.1
$region0: #{_lambda_.1}
  #allocation0 [shape = 'u32[]', space=smem, size = 0x4, offset = 0x4, fixed_abs, tag = 'smem constant byte address 0x4 - core index']
  #allocation1 [shape = 'u32[144,128]{1,0:T(1,128)}', space=vmem, size = 0x12000, scoped, tag = 'internal scratch']
  %s0 = inlined_call_operand.vmem [shape: bf16[32,8,8], index: 0, kind: input, shape index: {}]
  %s1 = inlined_call_operand.vmem [shape: bf16[32,8,8], index: 1, kind: input, shape index: {}]
  %s2 = inlined_call_operand.vmem [shape: bf16[32,8,128], index: 2, kind: input, shape index: {}]
  %s3 = inlined_call_operand.vmem [shape: f32[32,8,128], index: 3, kind: output, shape index: {}]
  %s4 = sld [smem:[#allocation0]]
  $region45: #{_lambda_.1} parent=0
    _
  %s6 = ssub.s32 1, %s4
  %s7 = scalar_select 0, %s6, %s4
  loop: start=0, step=1, limit=6
  $region2: #{_lambda_.1} parent=0 // loop_pre_header
    _
  $region3: #{_lambda_.1} parent=0 // loop_header
    %s9 = sphi 0, %s13
    %p10 = scmp.ge.s32.totalorder %s9, 6
    %s19 = sphi 0, %s21
    %s22 = sphi 0, %s19
    %s23 = sphi 0, %s22
    %s39 = sphi 0, %s23
    %s45 = sphi 0, %s47
    %s48 = sphi 0, %s45
    %s49 = sphi 0, %s48
    %s65 = sphi 0, %s49
    %s71 = sphi 0, %s73
    %s74 = sphi 0, %s71
    %s75 = sphi 0, %s74
    %s91 = sphi 0, %s75
    %s97 = sphi 0, %s99
    %s100 = sphi 0, %s97
    %s101 = sphi 0, %s100
    %s117 = sphi 0, %s101
  $region4: #{_lambda_.1} parent=0 // loop_header_branch
    %12 = sbr.rel (%p10) target = $region8
  $region5: #{_lambda_.1} parent=0 // loop_body
    %s14 = ssub.s32 %s9, 1
    %s15 = ssub.s32 %s9, 2
    %s16 = sadd.s32 %s9, 1
    %s17 = ssub.s32 %s9, %s16
    %p18 = scmp.eq.s32.totalorder %s17, 0
    %s20 = sadd.s32 %s19, 1
    %s21 = scalar_select %p18, %s19, %s20
    %p24 = pneg %p18
    %p25 = scmp.eq.s32.totalorder %s9, 3
    %p26 = por %p24, %p25
    %p27 = scmp.ne.s32.totalorder %s19, %s22
    %p28 = scmp.eq.s32.totalorder %s9, 0
    %p29 = por %p27, %p28
    %p30 = scmp.ne.s32.totalorder %s19, %s22
    %p31 = scmp.eq.s32.totalorder %s14, 3
    %p32 = por %p30, %p31
    %p33 = scmp.ne.s32.totalorder %s22, %s23
    %p34 = scmp.eq.s32.totalorder %s14, 0
    %p35 = por %p33, %p34
    %p36 = scmp.ne.s32.totalorder %s22, %s23
    %p37 = scmp.eq.s32.totalorder %s15, 3
    %p38 = por %p36, %p37
    %p40 = scmp.ne.s32.totalorder %s23, %s39
    %p41 = scmp.eq.s32.totalorder %s15, 0
    %p42 = por %p40, %p41
    %s43 = ssub.s32 %s9, %s16
    %p44 = scmp.eq.s32.totalorder %s43, 0
    %s46 = sadd.s32 %s45, 1
    %s47 = scalar_select %p44, %s45, %s46
    %p50 = pneg %p44
    %p51 = scmp.eq.s32.totalorder %s9, 3
    %p52 = por %p50, %p51
    %p53 = scmp.ne.s32.totalorder %s45, %s48
    %p54 = scmp.eq.s32.totalorder %s9, 0
    %p55 = por %p53, %p54
    %p56 = scmp.ne.s32.totalorder %s45, %s48
    %p57 = scmp.eq.s32.totalorder %s14, 3
    %p58 = por %p56, %p57
    %p59 = scmp.ne.s32.totalorder %s48, %s49
    %p60 = scmp.eq.s32.totalorder %s14, 0
    %p61 = por %p59, %p60
    %p62 = scmp.ne.s32.totalorder %s48, %s49
    %p63 = scmp.eq.s32.totalorder %s15, 3
    %p64 = por %p62, %p63
    %p66 = scmp.ne.s32.totalorder %s49, %s65
    %p67 = scmp.eq.s32.totalorder %s15, 0
    %p68 = por %p66, %p67
    %s69 = ssub.s32 %s9, %s16
    %p70 = scmp.eq.s32.totalorder %s69, 0
    %s72 = sadd.s32 %s71, 1
    %s73 = scalar_select %p70, %s71, %s72
    %p76 = pneg %p70
    %p77 = scmp.eq.s32.totalorder %s9, 3
    %p78 = por %p76, %p77
    %p79 = scmp.ne.s32.totalorder %s71, %s74
    %p80 = scmp.eq.s32.totalorder %s9, 0
    %p81 = por %p79, %p80
    %p82 = scmp.ne.s32.totalorder %s71, %s74
    %p83 = scmp.eq.s32.totalorder %s14, 3
    %p84 = por %p82, %p83
    %p85 = scmp.ne.s32.totalorder %s74, %s75
    %p86 = scmp.eq.s32.totalorder %s14, 0
    %p87 = por %p85, %p86
    %p88 = scmp.ne.s32.totalorder %s74, %s75
    %p89 = scmp.eq.s32.totalorder %s15, 3
    %p90 = por %p88, %p89
    %p92 = scmp.ne.s32.totalorder %s75, %s91
    %p93 = scmp.eq.s32.totalorder %s15, 0
    %p94 = por %p92, %p93
    %s95 = ssub.s32 %s9, %s16
    %p96 = scmp.eq.s32.totalorder %s95, 0
    %s98 = sadd.s32 %s97, 1
    %s99 = scalar_select %p96, %s97, %s98
    %p102 = pneg %p96
    %p103 = scmp.eq.s32.totalorder %s9, 3
    %p104 = por %p102, %p103
    %p105 = scmp.ne.s32.totalorder %s97, %s100
    %p106 = scmp.eq.s32.totalorder %s9, 0
    %p107 = por %p105, %p106
    %p108 = scmp.ne.s32.totalorder %s97, %s100
    %p109 = scmp.eq.s32.totalorder %s14, 3
    %p110 = por %p108, %p109
    %p111 = scmp.ne.s32.totalorder %s100, %s101
    %p112 = scmp.eq.s32.totalorder %s14, 0
    %p113 = por %p111, %p112
    %p114 = scmp.ne.s32.totalorder %s100, %s101
    %p115 = scmp.eq.s32.totalorder %s15, 3
    %p116 = por %p114, %p115
    %p118 = scmp.ne.s32.totalorder %s101, %s117
    %p119 = scmp.eq.s32.totalorder %s15, 0
    %p120 = por %p118, %p119
    %p121 = scmp.le.s32.totalorder 1, %s9
    %p122 = scmp.lt.s32.totalorder %s9, 5
    %p123 = pnand %p121, %p122
    %p124 = pneg %p123
    // Predicated region
    $region9: #{_lambda_.1} parent=5 // pred_check
      _
    $region10: #{_lambda_.1} parent=5 // pred_check_branch
      %126 = sbr.rel (%p123) target = $region12
    $region11: #{_lambda_.1} parent=5 // pred_region
      %s127 = ssub.s32 %s9, 1
    $region12: #{_lambda_.1} parent=5 // pred_fallthru
      _
    %p128 = scmp.lt.s32.totalorder %s9, 4
    // Predicated region
    $region13: #{_lambda_.1} parent=5 // pred_check
      %p129 = pneg %p128
    $region14: #{_lambda_.1} parent=5 // pred_check_branch
      %131 = sbr.rel (%p129) target = $region16
    $region15: #{_lambda_.1} parent=5 // pred_region
      // Predicated region
      $region17: #{_lambda_.1} parent=15 // pred_check
        %p132 = pneg %p29
      $region18: #{_lambda_.1} parent=15 // pred_check_branch
        %134 = sbr.rel (%p132) target = $region20
      $region19: #{_lambda_.1} parent=15 // pred_region
        %s135 = smul.u32 8, %s9
        %p136 = scmp.lt.s32.totalorder %s135, 31
        %s137 = scalar_select %p136, %s135, 31
        %s138 = smul.addr %s137, 4
        %s139 = scalar_lea.vmem %s0, %s138
        %s140 = smul.u32 8, %s9
      $region20: #{_lambda_.1} parent=15 // pred_fallthru
        _
      // Predicated region
      $region21: #{_lambda_.1} parent=15 // pred_check
        %p141 = pneg %p55
      $region22: #{_lambda_.1} parent=15 // pred_check_branch
        %143 = sbr.rel (%p141) target = $region24
      $region23: #{_lambda_.1} parent=15 // pred_region
        %s144 = smul.u32 8, %s9
        %p145 = scmp.lt.s32.totalorder %s144, 31
        %s146 = scalar_select %p145, %s144, 31
        %s147 = smul.addr %s146, 4
        %s148 = scalar_lea.vmem %s1, %s147
        %s149 = smul.u32 8, %s9
      $region24: #{_lambda_.1} parent=15 // pred_fallthru
        _
      // Predicated region
      $region25: #{_lambda_.1} parent=15 // pred_check
        %p150 = pneg %p81
      $region26: #{_lambda_.1} parent=15 // pred_check_branch
        %152 = sbr.rel (%p150) target = $region28
      $region27: #{_lambda_.1} parent=15 // pred_region
        %s153 = smul.u32 8, %s9
        %p154 = scmp.lt.s32.totalorder %s153, 31
        %s155 = scalar_select %p154, %s153, 31
        %s156 = smul.addr %s155, 4
        %s157 = scalar_lea.vmem %s2, %s156
        %s158 = smul.u32 8, %s9
      $region28: #{_lambda_.1} parent=15 // pred_fallthru
        _
    $region16: #{_lambda_.1} parent=5 // pred_fallthru
      _
    %p159 = scmp.le.s32.totalorder 1, %s9
    %p160 = scmp.lt.s32.totalorder %s9, 5
    %p161 = pnand %p159, %p160
    %p162 = pneg %p161
    // Predicated region
    $region29: #{_lambda_.1} parent=5 // pred_check
      _
    $region30: #{_lambda_.1} parent=5 // pred_check_branch
      %164 = sbr.rel (%p161) target = $region32
    $region31: #{_lambda_.1} parent=5 // pred_region
      %s165 = ssub.s32 %s9, 1
      %s166 = smul.u32 8, %s14
      %p167 = scmp.lt.s32.totalorder %s166, 31
      %s168 = scalar_select %p167, %s166, 31
      %s169 = smul.addr %s168, 4
      %s170 = scalar_lea.vmem %s0, %s169
      %p171 = pneg %p35
      %p172 = pneg %p32
      %s173 = smul.u32 8, %s14
      %p174 = scmp.lt.s32.totalorder %s173, 31
      %s175 = scalar_select %p174, %s173, 31
      %s176 = smul.addr %s175, 4
      %s177 = scalar_lea.vmem %s1, %s176
      %p178 = pneg %p61
      %p179 = pneg %p58
      %s180 = smul.u32 8, %s14
      %p181 = scmp.lt.s32.totalorder %s180, 31
      %s182 = scalar_select %p181, %s180, 31
      %s183 = smul.addr %s182, 4
      %s184 = scalar_lea.vmem %s2, %s183
      %p185 = pneg %p87
      %p186 = pneg %p84
      %p187 = pneg %p113
      %p188 = pneg %p110
      %s189 = smul.u32 8, %s14
      %p190 = scmp.lt.s32.totalorder %s189, 31
      %s191 = scalar_select %p190, %s189, 31
      %s192 = smul.addr %s191, 8
      %s193 = scalar_lea.vmem %s3, %s192
      %s194 = smul.u32 8, %s14
      %p195 = scmp.lt.s32.totalorder %s194, 31
      %s196 = scalar_select %p195, %s194, 31
      %s197 = smul.addr %s196, 4
      %s198 = scalar_lea.vmem %s0, %s197
      %s199 = smul.u32 8, %s14
      %s200 = smul.u32 8, %s14
      %p201 = scmp.lt.s32.totalorder %s200, 31
      %s202 = scalar_select %p201, %s200, 31
      %s203 = smul.addr %s202, 4
      %s204 = scalar_lea.vmem %s1, %s203
      %s205 = smul.u32 8, %s14
      %s206 = smul.u32 8, %s14
      %p207 = scmp.lt.s32.totalorder %s206, 31
      %s208 = scalar_select %p207, %s206, 31
      %s209 = smul.addr %s208, 4
      %s210 = scalar_lea.vmem %s2, %s209
      %s211 = smul.u32 8, %s14
      %s212 = smul.u32 8, %s14
      %p213 = scmp.lt.s32.totalorder %s212, 31
      %s214 = scalar_select %p213, %s212, 31
      %s215 = smul.addr %s214, 8
      %s216 = scalar_lea.vmem %s3, %s215
      %s217 = smul.u32 8, %s14
      %v219 = vld [vmem:[%s210] sm:$0xf]
      %v220 = vld [vmem:[%s210 + $0x4] sm:$0xf]
      %v221 = vld [vmem:[%s210 + $0x8] sm:$0xf]
      %v222 = vld [vmem:[%s210 + $0xc] sm:$0xf]
      %v223 = vld [vmem:[%s210 + $0x10] sm:$0xf]
      %v224 = vld [vmem:[%s210 + $0x14] sm:$0xf]
      %v225 = vld [vmem:[%s210 + $0x18] sm:$0xf]
      %v226 = vld [vmem:[%s210 + $0x1c] sm:$0xf]
      %v227 = vld [vmem:[%s198] sm:$0xf]
      %v228 = vld [vmem:[%s198 + $0x4] sm:$0xf]
      %v229 = vld [vmem:[%s198 + $0x8] sm:$0xf]
      %v230 = vld [vmem:[%s198 + $0xc] sm:$0xf]
      %v231 = vld [vmem:[%s198 + $0x10] sm:$0xf]
      %v232 = vld [vmem:[%s198 + $0x14] sm:$0xf]
      %v233 = vld [vmem:[%s198 + $0x18] sm:$0xf]
      %v234 = vld [vmem:[%s198 + $0x1c] sm:$0xf]
      %vm235 = vcmask 64512
      %v237 = vsel %vm235, %v227, 0
      %vm239 = vcmask 1043456
      %v241 = vsel %vm239, %v219, 0
      %243 = vmatprep.subr.bf16.mxu0 0
      %244 = vmatpush1.bf16.msra.mxu0 0
      %245 = vmatprep.subr.bf16.mxu0 0
      %246 = vmatpush1.bf16.msra.mxu0 0
      %247 = vmatprep.subr.bf16.mxu0 0
      %248 = vmatpush1.bf16.msra.mxu0 0
      %249 = vmatprep.subr.bf16.mxu0 0
      %250 = vmatpush1.bf16.msra.mxu0 0
      %251 = vmatprep.subr.bf16.mxu0 0
      %252 = vmatpush1.bf16.msra.mxu0 0
      %253 = vmatprep.subr.bf16.mxu0 0
      %254 = vmatpush1.bf16.msra.mxu0 0
      %255 = vmatprep.subr.bf16.mxu0 0
      %256 = vmatpush1.bf16.msra.mxu0 0
      %257 = vmatprep.subr.bf16.mxu0 0
      %258 = vmatpush1.bf16.msra.mxu0 %v241
      %259 = vmatprep.subr.bf16.mxu0 0
      %260 = vmatpush2.bf16.msra.mxu0 0
      %261 = vmatprep.subr.bf16.mxu0 0
      %262 = vmatpush2.bf16.msra.mxu0 0
      %263 = vmatprep.subr.bf16.mxu0 0
      %264 = vmatpush2.bf16.msra.mxu0 0
      %265 = vmatprep.subr.bf16.mxu0 0
      %266 = vmatpush2.bf16.msra.mxu0 0
      %267 = vmatprep.subr.bf16.mxu0 0
      %268 = vmatpush2.bf16.msra.mxu0 0
      %269 = vmatprep.subr.bf16.mxu0 0
      %270 = vmatpush2.bf16.msra.mxu0 0
      %271 = vmatprep.subr.bf16.mxu0 0
      %272 = vmatpush2.bf16.msra.mxu0 0
      %273 = vmatprep.subr.bf16.mxu0 0
      %274 = vmatpush2.bf16.msra.mxu0 0
      %275 = vmatprep.mubr.bf16.mxu0 0
      %276 = vmatmul.mubr.bf16.gmra.mxu0 %v237
      %v277 = vpop.f32.mrf.mxu0
      %v278 = vadd.f32 0.0, %v277
      %v279 = vpop.f32.mrf.mxu0
      %v280 = vpop.f32.mrf.mxu0
      %v281 = vpop.f32.mrf.mxu0
      %282 = vdwg.mxu0
      %v284 = vsel %vm235, %v228, 0
      %v287 = vsel %vm239, %v220, 0
      %289 = vmatprep.subr.bf16.mxu0 0
      %290 = vmatpush1.bf16.msra.mxu0 0
      %291 = vmatprep.subr.bf16.mxu0 0
      %292 = vmatpush1.bf16.msra.mxu0 0
      %293 = vmatprep.subr.bf16.mxu0 0
      %294 = vmatpush1.bf16.msra.mxu0 0
      %295 = vmatprep.subr.bf16.mxu0 0
      %296 = vmatpush1.bf16.msra.mxu0 0
      %297 = vmatprep.subr.bf16.mxu0 0
      %298 = vmatpush1.bf16.msra.mxu0 0
      %299 = vmatprep.subr.bf16.mxu0 0
      %300 = vmatpush1.bf16.msra.mxu0 0
      %301 = vmatprep.subr.bf16.mxu0 0
      %302 = vmatpush1.bf16.msra.mxu0 0
      %303 = vmatprep.subr.bf16.mxu0 0
      %304 = vmatpush1.bf16.msra.mxu0 %v287
      %305 = vmatprep.subr.bf16.mxu0 0
      %306 = vmatpush2.bf16.msra.mxu0 0
      %307 = vmatprep.subr.bf16.mxu0 0
      %308 = vmatpush2.bf16.msra.mxu0 0
      %309 = vmatprep.subr.bf16.mxu0 0
      %310 = vmatpush2.bf16.msra.mxu0 0
      %311 = vmatprep.subr.bf16.mxu0 0
      %312 = vmatpush2.bf16.msra.mxu0 0
      %313 = vmatprep.subr.bf16.mxu0 0
      %314 = vmatpush2.bf16.msra.mxu0 0
      %315 = vmatprep.subr.bf16.mxu0 0
      %316 = vmatpush2.bf16.msra.mxu0 0
      %317 = vmatprep.subr.bf16.mxu0 0
      %318 = vmatpush2.bf16.msra.mxu0 0
      %319 = vmatprep.subr.bf16.mxu0 0
      %320 = vmatpush2.bf16.msra.mxu0 0
      %321 = vmatprep.mubr.bf16.mxu0 0
      %322 = vmatmul.mubr.bf16.gmra.mxu0 %v284
      %v323 = vpop.f32.mrf.mxu0
      %v324 = vadd.f32 0.0, %v323
      %v325 = vpop.f32.mrf.mxu0
      %v326 = vpop.f32.mrf.mxu0
      %v327 = vpop.f32.mrf.mxu0
      %328 = vdwg.mxu0
      %v330 = vsel %vm235, %v229, 0
      %v333 = vsel %vm239, %v221, 0
      %335 = vmatprep.subr.bf16.mxu0 0
      %336 = vmatpush1.bf16.msra.mxu0 0
      %337 = vmatprep.subr.bf16.mxu0 0
      %338 = vmatpush1.bf16.msra.mxu0 0
      %339 = vmatprep.subr.bf16.mxu0 0
      %340 = vmatpush1.bf16.msra.mxu0 0
      %341 = vmatprep.subr.bf16.mxu0 0
      %342 = vmatpush1.bf16.msra.mxu0 0
      %343 = vmatprep.subr.bf16.mxu0 0
      %344 = vmatpush1.bf16.msra.mxu0 0
      %345 = vmatprep.subr.bf16.mxu0 0
      %346 = vmatpush1.bf16.msra.mxu0 0
      %347 = vmatprep.subr.bf16.mxu0 0
      %348 = vmatpush1.bf16.msra.mxu0 0
      %349 = vmatprep.subr.bf16.mxu0 0
      %350 = vmatpush1.bf16.msra.mxu0 %v333
      %351 = vmatprep.subr.bf16.mxu0 0
      %352 = vmatpush2.bf16.msra.mxu0 0
      %353 = vmatprep.subr.bf16.mxu0 0
      %354 = vmatpush2.bf16.msra.mxu0 0
      %355 = vmatprep.subr.bf16.mxu0 0
      %356 = vmatpush2.bf16.msra.mxu0 0
      %357 = vmatprep.subr.bf16.mxu0 0
      %358 = vmatpush2.bf16.msra.mxu0 0
      %359 = vmatprep.subr.bf16.mxu0 0
      %360 = vmatpush2.bf16.msra.mxu0 0
      %361 = vmatprep.subr.bf16.mxu0 0
      %362 = vmatpush2.bf16.msra.mxu0 0
      %363 = vmatprep.subr.bf16.mxu0 0
      %364 = vmatpush2.bf16.msra.mxu0 0
      %365 = vmatprep.subr.bf16.mxu0 0
      %366 = vmatpush2.bf16.msra.mxu0 0
      %367 = vmatprep.mubr.bf16.mxu0 0
      %368 = vmatmul.mubr.bf16.gmra.mxu0 %v330
      %v369 = vpop.f32.mrf.mxu0
      %v370 = vadd.f32 0.0, %v369
      %v371 = vpop.f32.mrf.mxu0
      %v372 = vpop.f32.mrf.mxu0
      %v373 = vpop.f32.mrf.mxu0
      %374 = vdwg.mxu0
      %v376 = vsel %vm235, %v230, 0
      %v379 = vsel %vm239, %v222, 0
      %381 = vmatprep.subr.bf16.mxu0 0
      %382 = vmatpush1.bf16.msra.mxu0 0
      %383 = vmatprep.subr.bf16.mxu0 0
      %384 = vmatpush1.bf16.msra.mxu0 0
      %385 = vmatprep.subr.bf16.mxu0 0
      %386 = vmatpush1.bf16.msra.mxu0 0
      %387 = vmatprep.subr.bf16.mxu0 0
      %388 = vmatpush1.bf16.msra.mxu0 0
      %389 = vmatprep.subr.bf16.mxu0 0
      %390 = vmatpush1.bf16.msra.mxu0 0
      %391 = vmatprep.subr.bf16.mxu0 0
      %392 = vmatpush1.bf16.msra.mxu0 0
      %393 = vmatprep.subr.bf16.mxu0 0
      %394 = vmatpush1.bf16.msra.mxu0 0
      %395 = vmatprep.subr.bf16.mxu0 0
      %396 = vmatpush1.bf16.msra.mxu0 %v379
      %397 = vmatprep.subr.bf16.mxu0 0
      %398 = vmatpush2.bf16.msra.mxu0 0
      %399 = vmatprep.subr.bf16.mxu0 0
      %400 = vmatpush2.bf16.msra.mxu0 0
      %401 = vmatprep.subr.bf16.mxu0 0
      %402 = vmatpush2.bf16.msra.mxu0 0
      %403 = vmatprep.subr.bf16.mxu0 0
      %404 = vmatpush2.bf16.msra.mxu0 0
      %405 = vmatprep.subr.bf16.mxu0 0
      %406 = vmatpush2.bf16.msra.mxu0 0
      %407 = vmatprep.subr.bf16.mxu0 0
      %408 = vmatpush2.bf16.msra.mxu0 0
      %409 = vmatprep.subr.bf16.mxu0 0
      %410 = vmatpush2.bf16.msra.mxu0 0
      %411 = vmatprep.subr.bf16.mxu0 0
      %412 = vmatpush2.bf16.msra.mxu0 0
      %413 = vmatprep.mubr.bf16.mxu0 0
      %414 = vmatmul.mubr.bf16.gmra.mxu0 %v376
      %v415 = vpop.f32.mrf.mxu0
      %v416 = vadd.f32 0.0, %v415
      %v417 = vpop.f32.mrf.mxu0
      %v418 = vpop.f32.mrf.mxu0
      %v419 = vpop.f32.mrf.mxu0
      %420 = vdwg.mxu0
      %v422 = vsel %vm235, %v231, 0
      %v425 = vsel %vm239, %v223, 0
      %427 = vmatprep.subr.bf16.mxu0 0
      %428 = vmatpush1.bf16.msra.mxu0 0
      %429 = vmatprep.subr.bf16.mxu0 0
      %430 = vmatpush1.bf16.msra.mxu0 0
      %431 = vmatprep.subr.bf16.mxu0 0
      %432 = vmatpush1.bf16.msra.mxu0 0
      %433 = vmatprep.subr.bf16.mxu0 0
      %434 = vmatpush1.bf16.msra.mxu0 0
      %435 = vmatprep.subr.bf16.mxu0 0
      %436 = vmatpush1.bf16.msra.mxu0 0
      %437 = vmatprep.subr.bf16.mxu0 0
      %438 = vmatpush1.bf16.msra.mxu0 0
      %439 = vmatprep.subr.bf16.mxu0 0
      %440 = vmatpush1.bf16.msra.mxu0 0
      %441 = vmatprep.subr.bf16.mxu0 0
      %442 = vmatpush1.bf16.msra.mxu0 %v425
      %443 = vmatprep.subr.bf16.mxu0 0
      %444 = vmatpush2.bf16.msra.mxu0 0
      %445 = vmatprep.subr.bf16.mxu0 0
      %446 = vmatpush2.bf16.msra.mxu0 0
      %447 = vmatprep.subr.bf16.mxu0 0
      %448 = vmatpush2.bf16.msra.mxu0 0
      %449 = vmatprep.subr.bf16.mxu0 0
      %450 = vmatpush2.bf16.msra.mxu0 0
      %451 = vmatprep.subr.bf16.mxu0 0
      %452 = vmatpush2.bf16.msra.mxu0 0
      %453 = vmatprep.subr.bf16.mxu0 0
      %454 = vmatpush2.bf16.msra.mxu0 0
      %455 = vmatprep.subr.bf16.mxu0 0
      %456 = vmatpush2.bf16.msra.mxu0 0
      %457 = vmatprep.subr.bf16.mxu0 0
      %458 = vmatpush2.bf16.msra.mxu0 0
      %459 = vmatprep.mubr.bf16.mxu0 0
      %460 = vmatmul.mubr.bf16.gmra.mxu0 %v422
      %v461 = vpop.f32.mrf.mxu0
      %v462 = vadd.f32 0.0, %v461
      %v463 = vpop.f32.mrf.mxu0
      %v464 = vpop.f32.mrf.mxu0
      %v465 = vpop.f32.mrf.mxu0
      %466 = vdwg.mxu0
      %v468 = vsel %vm235, %v232, 0
      %v471 = vsel %vm239, %v224, 0
      %473 = vmatprep.subr.bf16.mxu0 0
      %474 = vmatpush1.bf16.msra.mxu0 0
      %475 = vmatprep.subr.bf16.mxu0 0
      %476 = vmatpush1.bf16.msra.mxu0 0
      %477 = vmatprep.subr.bf16.mxu0 0
      %478 = vmatpush1.bf16.msra.mxu0 0
      %479 = vmatprep.subr.bf16.mxu0 0
      %480 = vmatpush1.bf16.msra.mxu0 0
      %481 = vmatprep.subr.bf16.mxu0 0
      %482 = vmatpush1.bf16.msra.mxu0 0
      %483 = vmatprep.subr.bf16.mxu0 0
      %484 = vmatpush1.bf16.msra.mxu0 0
      %485 = vmatprep.subr.bf16.mxu0 0
      %486 = vmatpush1.bf16.msra.mxu0 0
      %487 = vmatprep.subr.bf16.mxu0 0
      %488 = vmatpush1.bf16.msra.mxu0 %v471
      %489 = vmatprep.subr.bf16.mxu0 0
      %490 = vmatpush2.bf16.msra.mxu0 0
      %491 = vmatprep.subr.bf16.mxu0 0
      %492 = vmatpush2.bf16.msra.mxu0 0
      %493 = vmatprep.subr.bf16.mxu0 0
      %494 = vmatpush2.bf16.msra.mxu0 0
      %495 = vmatprep.subr.bf16.mxu0 0
      %496 = vmatpush2.bf16.msra.mxu0 0
      %497 = vmatprep.subr.bf16.mxu0 0
      %498 = vmatpush2.bf16.msra.mxu0 0
      %499 = vmatprep.subr.bf16.mxu0 0
      %500 = vmatpush2.bf16.msra.mxu0 0
      %501 = vmatprep.subr.bf16.mxu0 0
      %502 = vmatpush2.bf16.msra.mxu0 0
      %503 = vmatprep.subr.bf16.mxu0 0
      %504 = vmatpush2.bf16.msra.mxu0 0
      %505 = vmatprep.mubr.bf16.mxu0 0
      %506 = vmatmul.mubr.bf16.gmra.mxu0 %v468
      %v507 = vpop.f32.mrf.mxu0
      %v508 = vadd.f32 0.0, %v507
      %v509 = vpop.f32.mrf.mxu0
      %v510 = vpop.f32.mrf.mxu0
      %v511 = vpop.f32.mrf.mxu0
      %512 = vdwg.mxu0
      %v514 = vsel %vm235, %v233, 0
      %v517 = vsel %vm239, %v225, 0
      %519 = vmatprep.subr.bf16.mxu0 0
      %520 = vmatpush1.bf16.msra.mxu0 0
      %521 = vmatprep.subr.bf16.mxu0 0
      %522 = vmatpush1.bf16.msra.mxu0 0
      %523 = vmatprep.subr.bf16.mxu0 0
      %524 = vmatpush1.bf16.msra.mxu0 0
      %525 = vmatprep.subr.bf16.mxu0 0
      %526 = vmatpush1.bf16.msra.mxu0 0
      %527 = vmatprep.subr.bf16.mxu0 0
      %528 = vmatpush1.bf16.msra.mxu0 0
      %529 = vmatprep.subr.bf16.mxu0 0
      %530 = vmatpush1.bf16.msra.mxu0 0
      %531 = vmatprep.subr.bf16.mxu0 0
      %532 = vmatpush1.bf16.msra.mxu0 0
      %533 = vmatprep.subr.bf16.mxu0 0
      %534 = vmatpush1.bf16.msra.mxu0 %v517
      %535 = vmatprep.subr.bf16.mxu0 0
      %536 = vmatpush2.bf16.msra.mxu0 0
      %537 = vmatprep.subr.bf16.mxu0 0
      %538 = vmatpush2.bf16.msra.mxu0 0
      %539 = vmatprep.subr.bf16.mxu0 0
      %540 = vmatpush2.bf16.msra.mxu0 0
      %541 = vmatprep.subr.bf16.mxu0 0
      %542 = vmatpush2.bf16.msra.mxu0 0
      %543 = vmatprep.subr.bf16.mxu0 0
      %544 = vmatpush2.bf16.msra.mxu0 0
      %545 = vmatprep.subr.bf16.mxu0 0
      %546 = vmatpush2.bf16.msra.mxu0 0
      %547 = vmatprep.subr.bf16.mxu0 0
      %548 = vmatpush2.bf16.msra.mxu0 0
      %549 = vmatprep.subr.bf16.mxu0 0
      %550 = vmatpush2.bf16.msra.mxu0 0
      %551 = vmatprep.mubr.bf16.mxu0 0
      %552 = vmatmul.mubr.bf16.gmra.mxu0 %v514
      %v553 = vpop.f32.mrf.mxu0
      %v554 = vadd.f32 0.0, %v553
      %v555 = vpop.f32.mrf.mxu0
      %v556 = vpop.f32.mrf.mxu0
      %v557 = vpop.f32.mrf.mxu0
      %558 = vdwg.mxu0
      %v560 = vsel %vm235, %v234, 0
      %v563 = vsel %vm239, %v226, 0
      %565 = vmatprep.subr.bf16.mxu0 0
      %566 = vmatpush1.bf16.msra.mxu0 0
      %567 = vmatprep.subr.bf16.mxu0 0
      %568 = vmatpush1.bf16.msra.mxu0 0
      %569 = vmatprep.subr.bf16.mxu0 0
      %570 = vmatpush1.bf16.msra.mxu0 0
      %571 = vmatprep.subr.bf16.mxu0 0
      %572 = vmatpush1.bf16.msra.mxu0 0
      %573 = vmatprep.subr.bf16.mxu0 0
      %574 = vmatpush1.bf16.msra.mxu0 0
      %575 = vmatprep.subr.bf16.mxu0 0
      %576 = vmatpush1.bf16.msra.mxu0 0
      %577 = vmatprep.subr.bf16.mxu0 0
      %578 = vmatpush1.bf16.msra.mxu0 0
      %579 = vmatprep.subr.bf16.mxu0 0
      %580 = vmatpush1.bf16.msra.mxu0 %v563
      %581 = vmatprep.subr.bf16.mxu0 0
      %582 = vmatpush2.bf16.msra.mxu0 0
      %583 = vmatprep.subr.bf16.mxu0 0
      %584 = vmatpush2.bf16.msra.mxu0 0
      %585 = vmatprep.subr.bf16.mxu0 0
      %586 = vmatpush2.bf16.msra.mxu0 0
      %587 = vmatprep.subr.bf16.mxu0 0
      %588 = vmatpush2.bf16.msra.mxu0 0
      %589 = vmatprep.subr.bf16.mxu0 0
      %590 = vmatpush2.bf16.msra.mxu0 0
      %591 = vmatprep.subr.bf16.mxu0 0
      %592 = vmatpush2.bf16.msra.mxu0 0
      %593 = vmatprep.subr.bf16.mxu0 0
      %594 = vmatpush2.bf16.msra.mxu0 0
      %595 = vmatprep.subr.bf16.mxu0 0
      %596 = vmatpush2.bf16.msra.mxu0 0
      %597 = vmatprep.mubr.bf16.mxu0 0
      %598 = vmatmul.mubr.bf16.gmra.mxu0 %v560
      %v599 = vpop.f32.mrf.mxu0
      %v600 = vadd.f32 0.0, %v599
      %v601 = vpop.f32.mrf.mxu0
      %v602 = vpop.f32.mrf.mxu0
      %v603 = vpop.f32.mrf.mxu0
      %604 = vdwg.mxu0
      %v605 = vld [vmem:[%s204] sm:$0xf]
      %v606 = vld [vmem:[%s204 + $0x4] sm:$0xf]
      %v607 = vld [vmem:[%s204 + $0x8] sm:$0xf]
      %v608 = vld [vmem:[%s204 + $0xc] sm:$0xf]
      %v609 = vld [vmem:[%s204 + $0x10] sm:$0xf]
      %v610 = vld [vmem:[%s204 + $0x14] sm:$0xf]
      %v611 = vld [vmem:[%s204 + $0x18] sm:$0xf]
      %v612 = vld [vmem:[%s204 + $0x1c] sm:$0xf]
      %v614 = vsel %vm235, %v605, 0
      %616 = vmatprep.subr.bf16.mxu0 0
      %617 = vmatpush1.bf16.msra.mxu0 0
      %618 = vmatprep.subr.bf16.mxu0 0
      %619 = vmatpush1.bf16.msra.mxu0 0
      %620 = vmatprep.subr.bf16.mxu0 0
      %621 = vmatpush1.bf16.msra.mxu0 0
      %622 = vmatprep.subr.bf16.mxu0 0
      %623 = vmatpush1.bf16.msra.mxu0 0
      %624 = vmatprep.subr.bf16.mxu0 0
      %625 = vmatpush1.bf16.msra.mxu0 0
      %626 = vmatprep.subr.bf16.mxu0 0
      %627 = vmatpush1.bf16.msra.mxu0 0
      %628 = vmatprep.subr.bf16.mxu0 0
      %629 = vmatpush1.bf16.msra.mxu0 0
      %630 = vmatprep.subr.bf16.mxu0 0
      %631 = vmatpush1.bf16.msra.mxu0 %v241
      %632 = vmatprep.subr.bf16.mxu0 0
      %633 = vmatpush2.bf16.msra.mxu0 0
      %634 = vmatprep.subr.bf16.mxu0 0
      %635 = vmatpush2.bf16.msra.mxu0 0
      %636 = vmatprep.subr.bf16.mxu0 0
      %637 = vmatpush2.bf16.msra.mxu0 0
      %638 = vmatprep.subr.bf16.mxu0 0
      %639 = vmatpush2.bf16.msra.mxu0 0
      %640 = vmatprep.subr.bf16.mxu0 0
      %641 = vmatpush2.bf16.msra.mxu0 0
      %642 = vmatprep.subr.bf16.mxu0 0
      %643 = vmatpush2.bf16.msra.mxu0 0
      %644 = vmatprep.subr.bf16.mxu0 0
      %645 = vmatpush2.bf16.msra.mxu0 0
      %646 = vmatprep.subr.bf16.mxu0 0
      %647 = vmatpush2.bf16.msra.mxu0 0
      %648 = vmatprep.mubr.bf16.mxu0 0
      %649 = vmatmul.mubr.bf16.gmra.mxu0 %v614
      %v650 = vpop.f32.mrf.mxu0
      %v651 = vadd.f32 0.0, %v650
      %v652 = vpop.f32.mrf.mxu0
      %v653 = vpop.f32.mrf.mxu0
      %v654 = vpop.f32.mrf.mxu0
      %655 = vdwg.mxu0
      %v657 = vsel %vm235, %v606, 0
      %659 = vmatprep.subr.bf16.mxu0 0
      %660 = vmatpush1.bf16.msra.mxu0 0
      %661 = vmatprep.subr.bf16.mxu0 0
      %662 = vmatpush1.bf16.msra.mxu0 0
      %663 = vmatprep.subr.bf16.mxu0 0
      %664 = vmatpush1.bf16.msra.mxu0 0
      %665 = vmatprep.subr.bf16.mxu0 0
      %666 = vmatpush1.bf16.msra.mxu0 0
      %667 = vmatprep.subr.bf16.mxu0 0
      %668 = vmatpush1.bf16.msra.mxu0 0
      %669 = vmatprep.subr.bf16.mxu0 0
      %670 = vmatpush1.bf16.msra.mxu0 0
      %671 = vmatprep.subr.bf16.mxu0 0
      %672 = vmatpush1.bf16.msra.mxu0 0
      %673 = vmatprep.subr.bf16.mxu0 0
      %674 = vmatpush1.bf16.msra.mxu0 %v287
      %675 = vmatprep.subr.bf16.mxu0 0
      %676 = vmatpush2.bf16.msra.mxu0 0
      %677 = vmatprep.subr.bf16.mxu0 0
      %678 = vmatpush2.bf16.msra.mxu0 0
      %679 = vmatprep.subr.bf16.mxu0 0
      %680 = vmatpush2.bf16.msra.mxu0 0
      %681 = vmatprep.subr.bf16.mxu0 0
      %682 = vmatpush2.bf16.msra.mxu0 0
      %683 = vmatprep.subr.bf16.mxu0 0
      %684 = vmatpush2.bf16.msra.mxu0 0
      %685 = vmatprep.subr.bf16.mxu0 0
      %686 = vmatpush2.bf16.msra.mxu0 0
      %687 = vmatprep.subr.bf16.mxu0 0
      %688 = vmatpush2.bf16.msra.mxu0 0
      %689 = vmatprep.subr.bf16.mxu0 0
      %690 = vmatpush2.bf16.msra.mxu0 0
      %691 = vmatprep.mubr.bf16.mxu0 0
      %692 = vmatmul.mubr.bf16.gmra.mxu0 %v657
      %v693 = vpop.f32.mrf.mxu0
      %v694 = vadd.f32 0.0, %v693
      %v695 = vpop.f32.mrf.mxu0
      %v696 = vpop.f32.mrf.mxu0
      %v697 = vpop.f32.mrf.mxu0
      %698 = vdwg.mxu0
      %v700 = vsel %vm235, %v607, 0
      %702 = vmatprep.subr.bf16.mxu0 0
      %703 = vmatpush1.bf16.msra.mxu0 0
      %704 = vmatprep.subr.bf16.mxu0 0
      %705 = vmatpush1.bf16.msra.mxu0 0
      %706 = vmatprep.subr.bf16.mxu0 0
      %707 = vmatpush1.bf16.msra.mxu0 0
      %708 = vmatprep.subr.bf16.mxu0 0
      %709 = vmatpush1.bf16.msra.mxu0 0
      %710 = vmatprep.subr.bf16.mxu0 0
      %711 = vmatpush1.bf16.msra.mxu0 0
      %712 = vmatprep.subr.bf16.mxu0 0
      %713 = vmatpush1.bf16.msra.mxu0 0
      %714 = vmatprep.subr.bf16.mxu0 0
      %715 = vmatpush1.bf16.msra.mxu0 0
      %716 = vmatprep.subr.bf16.mxu0 0
      %717 = vmatpush1.bf16.msra.mxu0 %v333
      %718 = vmatprep.subr.bf16.mxu0 0
      %719 = vmatpush2.bf16.msra.mxu0 0
      %720 = vmatprep.subr.bf16.mxu0 0
      %721 = vmatpush2.bf16.msra.mxu0 0
      %722 = vmatprep.subr.bf16.mxu0 0
      %723 = vmatpush2.bf16.msra.mxu0 0
      %724 = vmatprep.subr.bf16.mxu0 0
      %725 = vmatpush2.bf16.msra.mxu0 0
      %726 = vmatprep.subr.bf16.mxu0 0
      %727 = vmatpush2.bf16.msra.mxu0 0
      %728 = vmatprep.subr.bf16.mxu0 0
      %729 = vmatpush2.bf16.msra.mxu0 0
      %730 = vmatprep.subr.bf16.mxu0 0
      %731 = vmatpush2.bf16.msra.mxu0 0
      %732 = vmatprep.subr.bf16.mxu0 0
      %733 = vmatpush2.bf16.msra.mxu0 0
      %734 = vmatprep.mubr.bf16.mxu0 0
      %735 = vmatmul.mubr.bf16.gmra.mxu0 %v700
      %v736 = vpop.f32.mrf.mxu0
      %v737 = vadd.f32 0.0, %v736
      %v738 = vpop.f32.mrf.mxu0
      %v739 = vpop.f32.mrf.mxu0
      %v740 = vpop.f32.mrf.mxu0
      %741 = vdwg.mxu0
      %v743 = vsel %vm235, %v608, 0
      %745 = vmatprep.subr.bf16.mxu0 0
      %746 = vmatpush1.bf16.msra.mxu0 0
      %747 = vmatprep.subr.bf16.mxu0 0
      %748 = vmatpush1.bf16.msra.mxu0 0
      %749 = vmatprep.subr.bf16.mxu0 0
      %750 = vmatpush1.bf16.msra.mxu0 0
      %751 = vmatprep.subr.bf16.mxu0 0
      %752 = vmatpush1.bf16.msra.mxu0 0
      %753 = vmatprep.subr.bf16.mxu0 0
      %754 = vmatpush1.bf16.msra.mxu0 0
      %755 = vmatprep.subr.bf16.mxu0 0
      %756 = vmatpush1.bf16.msra.mxu0 0
      %757 = vmatprep.subr.bf16.mxu0 0
      %758 = vmatpush1.bf16.msra.mxu0 0
      %759 = vmatprep.subr.bf16.mxu0 0
      %760 = vmatpush1.bf16.msra.mxu0 %v379
      %761 = vmatprep.subr.bf16.mxu0 0
      %762 = vmatpush2.bf16.msra.mxu0 0
      %763 = vmatprep.subr.bf16.mxu0 0
      %764 = vmatpush2.bf16.msra.mxu0 0
      %765 = vmatprep.subr.bf16.mxu0 0
      %766 = vmatpush2.bf16.msra.mxu0 0
      %767 = vmatprep.subr.bf16.mxu0 0
      %768 = vmatpush2.bf16.msra.mxu0 0
      %769 = vmatprep.subr.bf16.mxu0 0
      %770 = vmatpush2.bf16.msra.mxu0 0
      %771 = vmatprep.subr.bf16.mxu0 0
      %772 = vmatpush2.bf16.msra.mxu0 0
      %773 = vmatprep.subr.bf16.mxu0 0
      %774 = vmatpush2.bf16.msra.mxu0 0
      %775 = vmatprep.subr.bf16.mxu0 0
      %776 = vmatpush2.bf16.msra.mxu0 0
      %777 = vmatprep.mubr.bf16.mxu0 0
      %778 = vmatmul.mubr.bf16.gmra.mxu0 %v743
      %v779 = vpop.f32.mrf.mxu0
      %v780 = vadd.f32 0.0, %v779
      %v781 = vpop.f32.mrf.mxu0
      %v782 = vpop.f32.mrf.mxu0
      %v783 = vpop.f32.mrf.mxu0
      %784 = vdwg.mxu0
      %v786 = vsel %vm235, %v609, 0
      %788 = vmatprep.subr.bf16.mxu0 0
      %789 = vmatpush1.bf16.msra.mxu0 0
      %790 = vmatprep.subr.bf16.mxu0 0
      %791 = vmatpush1.bf16.msra.mxu0 0
      %792 = vmatprep.subr.bf16.mxu0 0
      %793 = vmatpush1.bf16.msra.mxu0 0
      %794 = vmatprep.subr.bf16.mxu0 0
      %795 = vmatpush1.bf16.msra.mxu0 0
      %796 = vmatprep.subr.bf16.mxu0 0
      %797 = vmatpush1.bf16.msra.mxu0 0
      %798 = vmatprep.subr.bf16.mxu0 0
      %799 = vmatpush1.bf16.msra.mxu0 0
      %800 = vmatprep.subr.bf16.mxu0 0
      %801 = vmatpush1.bf16.msra.mxu0 0
      %802 = vmatprep.subr.bf16.mxu0 0
      %803 = vmatpush1.bf16.msra.mxu0 %v425
      %804 = vmatprep.subr.bf16.mxu0 0
      %805 = vmatpush2.bf16.msra.mxu0 0
      %806 = vmatprep.subr.bf16.mxu0 0
      %807 = vmatpush2.bf16.msra.mxu0 0
      %808 = vmatprep.subr.bf16.mxu0 0
      %809 = vmatpush2.bf16.msra.mxu0 0
      %810 = vmatprep.subr.bf16.mxu0 0
      %811 = vmatpush2.bf16.msra.mxu0 0
      %812 = vmatprep.subr.bf16.mxu0 0
      %813 = vmatpush2.bf16.msra.mxu0 0
      %814 = vmatprep.subr.bf16.mxu0 0
      %815 = vmatpush2.bf16.msra.mxu0 0
      %816 = vmatprep.subr.bf16.mxu0 0
      %817 = vmatpush2.bf16.msra.mxu0 0
      %818 = vmatprep.subr.bf16.mxu0 0
      %819 = vmatpush2.bf16.msra.mxu0 0
      %820 = vmatprep.mubr.bf16.mxu0 0
      %821 = vmatmul.mubr.bf16.gmra.mxu0 %v786
      %v822 = vpop.f32.mrf.mxu0
      %v823 = vadd.f32 0.0, %v822
      %v824 = vpop.f32.mrf.mxu0
      %v825 = vpop.f32.mrf.mxu0
      %v826 = vpop.f32.mrf.mxu0
      %827 = vdwg.mxu0
      %v829 = vsel %vm235, %v610, 0
      %831 = vmatprep.subr.bf16.mxu0 0
      %832 = vmatpush1.bf16.msra.mxu0 0
      %833 = vmatprep.subr.bf16.mxu0 0
      %834 = vmatpush1.bf16.msra.mxu0 0
      %835 = vmatprep.subr.bf16.mxu0 0
      %836 = vmatpush1.bf16.msra.mxu0 0
      %837 = vmatprep.subr.bf16.mxu0 0
      %838 = vmatpush1.bf16.msra.mxu0 0
      %839 = vmatprep.subr.bf16.mxu0 0
      %840 = vmatpush1.bf16.msra.mxu0 0
      %841 = vmatprep.subr.bf16.mxu0 0
      %842 = vmatpush1.bf16.msra.mxu0 0
      %843 = vmatprep.subr.bf16.mxu0 0
      %844 = vmatpush1.bf16.msra.mxu0 0
      %845 = vmatprep.subr.bf16.mxu0 0
      %846 = vmatpush1.bf16.msra.mxu0 %v471
      %847 = vmatprep.subr.bf16.mxu0 0
      %848 = vmatpush2.bf16.msra.mxu0 0
      %849 = vmatprep.subr.bf16.mxu0 0
      %850 = vmatpush2.bf16.msra.mxu0 0
      %851 = vmatprep.subr.bf16.mxu0 0
      %852 = vmatpush2.bf16.msra.mxu0 0
      %853 = vmatprep.subr.bf16.mxu0 0
      %854 = vmatpush2.bf16.msra.mxu0 0
      %855 = vmatprep.subr.bf16.mxu0 0
      %856 = vmatpush2.bf16.msra.mxu0 0
      %857 = vmatprep.subr.bf16.mxu0 0
      %858 = vmatpush2.bf16.msra.mxu0 0
      %859 = vmatprep.subr.bf16.mxu0 0
      %860 = vmatpush2.bf16.msra.mxu0 0
      %861 = vmatprep.subr.bf16.mxu0 0
      %862 = vmatpush2.bf16.msra.mxu0 0
      %863 = vmatprep.mubr.bf16.mxu0 0
      %864 = vmatmul.mubr.bf16.gmra.mxu0 %v829
      %v865 = vpop.f32.mrf.mxu0
      %v866 = vadd.f32 0.0, %v865
      %v867 = vpop.f32.mrf.mxu0
      %v868 = vpop.f32.mrf.mxu0
      %v869 = vpop.f32.mrf.mxu0
      %870 = vdwg.mxu0
      %v872 = vsel %vm235, %v611, 0
      %874 = vmatprep.subr.bf16.mxu0 0
      %875 = vmatpush1.bf16.msra.mxu0 0
      %876 = vmatprep.subr.bf16.mxu0 0
      %877 = vmatpush1.bf16.msra.mxu0 0
      %878 = vmatprep.subr.bf16.mxu0 0
      %879 = vmatpush1.bf16.msra.mxu0 0
      %880 = vmatprep.subr.bf16.mxu0 0
      %881 = vmatpush1.bf16.msra.mxu0 0
      %882 = vmatprep.subr.bf16.mxu0 0
      %883 = vmatpush1.bf16.msra.mxu0 0
      %884 = vmatprep.subr.bf16.mxu0 0
      %885 = vmatpush1.bf16.msra.mxu0 0
      %886 = vmatprep.subr.bf16.mxu0 0
      %887 = vmatpush1.bf16.msra.mxu0 0
      %888 = vmatprep.subr.bf16.mxu0 0
      %889 = vmatpush1.bf16.msra.mxu0 %v517
      %890 = vmatprep.subr.bf16.mxu0 0
      %891 = vmatpush2.bf16.msra.mxu0 0
      %892 = vmatprep.subr.bf16.mxu0 0
      %893 = vmatpush2.bf16.msra.mxu0 0
      %894 = vmatprep.subr.bf16.mxu0 0
      %895 = vmatpush2.bf16.msra.mxu0 0
      %896 = vmatprep.subr.bf16.mxu0 0
      %897 = vmatpush2.bf16.msra.mxu0 0
      %898 = vmatprep.subr.bf16.mxu0 0
      %899 = vmatpush2.bf16.msra.mxu0 0
      %900 = vmatprep.subr.bf16.mxu0 0
      %901 = vmatpush2.bf16.msra.mxu0 0
      %902 = vmatprep.subr.bf16.mxu0 0
      %903 = vmatpush2.bf16.msra.mxu0 0
      %904 = vmatprep.subr.bf16.mxu0 0
      %905 = vmatpush2.bf16.msra.mxu0 0
      %906 = vmatprep.mubr.bf16.mxu0 0
      %907 = vmatmul.mubr.bf16.gmra.mxu0 %v872
      %v908 = vpop.f32.mrf.mxu0
      %v909 = vadd.f32 0.0, %v908
      %v910 = vpop.f32.mrf.mxu0
      %v911 = vpop.f32.mrf.mxu0
      %v912 = vpop.f32.mrf.mxu0
      %913 = vdwg.mxu0
      %v915 = vsel %vm235, %v612, 0
      %917 = vmatprep.subr.bf16.mxu0 0
      %918 = vmatpush1.bf16.msra.mxu0 0
      %919 = vmatprep.subr.bf16.mxu0 0
      %920 = vmatpush1.bf16.msra.mxu0 0
      %921 = vmatprep.subr.bf16.mxu0 0
      %922 = vmatpush1.bf16.msra.mxu0 0
      %923 = vmatprep.subr.bf16.mxu0 0
      %924 = vmatpush1.bf16.msra.mxu0 0
      %925 = vmatprep.subr.bf16.mxu0 0
      %926 = vmatpush1.bf16.msra.mxu0 0
      %927 = vmatprep.subr.bf16.mxu0 0
      %928 = vmatpush1.bf16.msra.mxu0 0
      %929 = vmatprep.subr.bf16.mxu0 0
      %930 = vmatpush1.bf16.msra.mxu0 0
      %931 = vmatprep.subr.bf16.mxu0 0
      %932 = vmatpush1.bf16.msra.mxu0 %v563
      %933 = vmatprep.subr.bf16.mxu0 0
      %934 = vmatpush2.bf16.msra.mxu0 0
      %935 = vmatprep.subr.bf16.mxu0 0
      %936 = vmatpush2.bf16.msra.mxu0 0
      %937 = vmatprep.subr.bf16.mxu0 0
      %938 = vmatpush2.bf16.msra.mxu0 0
      %939 = vmatprep.subr.bf16.mxu0 0
      %940 = vmatpush2.bf16.msra.mxu0 0
      %941 = vmatprep.subr.bf16.mxu0 0
      %942 = vmatpush2.bf16.msra.mxu0 0
      %943 = vmatprep.subr.bf16.mxu0 0
      %944 = vmatpush2.bf16.msra.mxu0 0
      %945 = vmatprep.subr.bf16.mxu0 0
      %946 = vmatpush2.bf16.msra.mxu0 0
      %947 = vmatprep.subr.bf16.mxu0 0
      %948 = vmatpush2.bf16.msra.mxu0 0
      %949 = vmatprep.mubr.bf16.mxu0 0
      %950 = vmatmul.mubr.bf16.gmra.mxu0 %v915
      %v951 = vpop.f32.mrf.mxu0
      %v952 = vadd.f32 0.0, %v951
      %v953 = vpop.f32.mrf.mxu0
      %v954 = vpop.f32.mrf.mxu0
      %v955 = vpop.f32.mrf.mxu0
      %956 = vdwg.mxu0
      %957 = vrot.lane.b32.xlu0 %v651, 64
      %v958 = vpop.permute.xlu0 %957
      %959 = vrot.lane.b32.xlu0 %v694, 64
      %v960 = vpop.permute.xlu0 %959
      %961 = vrot.lane.b32.xlu0 %v737, 64
      %v962 = vpop.permute.xlu0 %961
      %963 = vrot.lane.b32.xlu0 %v780, 64
      %v964 = vpop.permute.xlu0 %963
      %965 = vrot.lane.b32.xlu0 %v823, 64
      %v966 = vpop.permute.xlu0 %965
      %967 = vrot.lane.b32.xlu0 %v866, 64
      %v968 = vpop.permute.xlu0 %967
      %969 = vrot.lane.b32.xlu0 %v909, 64
      %v970 = vpop.permute.xlu0 %969
      %971 = vrot.lane.b32.xlu0 %v952, 64
      %v972 = vpop.permute.xlu0 %971
      %v973 = vlaneseq
      %v974 = vand.u32 %v973, 127
      %vm975 = vcmp.lt.s32.totalorder %v974, 64
      %v976 = vsel %vm975, -1.0, 1.0
      %v977 = vmul.f32 %v976, %v958
      %v978 = vmul.f32 %v976, %v960
      %v979 = vmul.f32 %v976, %v962
      %v980 = vmul.f32 %v976, %v964
      %v981 = vmul.f32 %v976, %v966
      %v982 = vmul.f32 %v976, %v968
      %v983 = vmul.f32 %v976, %v970
      %v984 = vmul.f32 %v976, %v972
      %v985 = vadd.f32 %v278, %v977
      %v986 = vadd.f32 %v324, %v978
      %v987 = vadd.f32 %v370, %v979
      %v988 = vadd.f32 %v416, %v980
      %v989 = vadd.f32 %v462, %v981
      %v990 = vadd.f32 %v508, %v982
      %v991 = vadd.f32 %v554, %v983
      %v992 = vadd.f32 %v600, %v984
      %993 = vst [vmem:[%s216] sm:$0xff] %v985
      %994 = vst [vmem:[%s216 + $0x8] sm:$0xff] %v986
      %995 = vst [vmem:[%s216 + $0x10] sm:$0xff] %v987
      %996 = vst [vmem:[%s216 + $0x18] sm:$0xff] %v988
      %997 = vst [vmem:[%s216 + $0x20] sm:$0xff] %v989
      %998 = vst [vmem:[%s216 + $0x28] sm:$0xff] %v990
      %999 = vst [vmem:[%s216 + $0x30] sm:$0xff] %v991
      %1000 = vst [vmem:[%s216 + $0x38] sm:$0xff] %v992
      %s1001 = smul.u32 8, %s14
      %p1002 = scmp.lt.s32.totalorder %s1001, 31
      %s1003 = scalar_select %p1002, %s1001, 31
      %s1004 = smul.addr %s1003, 8
      %s1005 = scalar_lea.vmem %s3, %s1004
      // Predicated region
      $region33: #{_lambda_.1} parent=31 // pred_check
        %p1006 = pneg %p110
      $region34: #{_lambda_.1} parent=31 // pred_check_branch
        %1008 = sbr.rel (%p1006) target = $region36
      $region35: #{_lambda_.1} parent=31 // pred_region
        %s1009 = smul.u32 8, %s14
      $region36: #{_lambda_.1} parent=31 // pred_fallthru
        _
    $region32: #{_lambda_.1} parent=5 // pred_fallthru
      _
    %p1010 = scmp.le.s32.totalorder 2, %s9
    // Predicated region
    $region37: #{_lambda_.1} parent=5 // pred_check
      %p1011 = pneg %p1010
    $region38: #{_lambda_.1} parent=5 // pred_check_branch
      %1013 = sbr.rel (%p1011) target = $region40
    $region39: #{_lambda_.1} parent=5 // pred_region
      %s1014 = ssub.s32 %s9, 2
      // Predicated region
      $region41: #{_lambda_.1} parent=39 // pred_check
        %p1015 = pneg %p116
      $region42: #{_lambda_.1} parent=39 // pred_check_branch
        %1017 = sbr.rel (%p1015) target = $region44
      $region43: #{_lambda_.1} parent=39 // pred_region
        %s1018 = smul.u32 8, %s15
        %p1019 = scmp.lt.s32.totalorder %s1018, 31
        %s1020 = scalar_select %p1019, %s1018, 31
        %s1021 = smul.addr %s1020, 8
        %s1022 = scalar_lea.vmem %s3, %s1021
      $region44: #{_lambda_.1} parent=39 // pred_fallthru
        _
    $region40: #{_lambda_.1} parent=5 // pred_fallthru
      _
  $region6: #{_lambda_.1} parent=0 // loop_footer
    %s13 = sadd.s32 1, %s9
  $region7: #{_lambda_.1} parent=0 // loop_footer_branch
    %8 = sbr.rel target = $region3
  $region8: #{_lambda_.1} parent=0 // loop_exit
    _

</llo_original>
